<compile_context>
chip_gen: v7x
topology: tpu7x:2x2x1
jax: 0.10.0
libtpu: 0.0.40
codegen_flags: <defaults>
</compile_context>

<pallas_src>
import jax
import jax.numpy as jnp
from jax.experimental import pallas as pl
from jax.experimental.pallas import tpu as pltpu

# ---------------- synthetic config (mirrors the PyTorch module) --------------
SINGLE_ID_FEATURES = ["userid", "feedid", "authorid"]
MULTI_ID_FEATURES = ["hist_user_sequence", "hist_feedid_seq", "hist_authorid_seq"]
DENSE_FEATURES = ["d0", "d1", "d2", "d3"]

B = 8            # batch
S = 8            # max_seq_len
E = 8            # embedding_size
C = 3            # class_num (number of output heads)
INTER = 3        # inter_feature_num
L = 2            # cross-net layer_num
H1, H2 = 200, 80 # MLP hidden sizes (last linear -> 1)
BN_EPS = 1e-5
VOCABS = {"userid": 50, "feedid": 60, "authorid": 40}

N_SINGLE = len(SINGLE_ID_FEATURES)
N_MULTI = len(MULTI_ID_FEATURES)
N_DENSE = len(DENSE_FEATURES)

# feature_dim as in the module:
D = E * (N_SINGLE + N_MULTI + 2 * INTER) + N_DENSE   # = 100

# lane-aligned padded dims (zero padding, exact math)
D_PAD = 128      # merged feature width on the lane axis
H1P = 256        # per-head hidden-1 lane block inside the fused layer-1 matmul
H2P = 128        # padded hidden-2
OUT_PAD = 128    # lane-dense output block (first C lanes valid)
MAX_TB = 256     # batch tile (rows per grid step)


def _round_up(x, m):
    return (x + m - 1) // m * m


# ---------------- the single fused Pallas kernel -------------------------------
def dcn_fused_kernel(x0_ref, cw_ref, cb_ref,
                     w1_ref, b1_ref,
                     w2_ref, b2_ref,
                     w3_ref, b3_ref,
                     out_ref):
    tb = x0_ref.shape[0]
    x0 = x0_ref[...]                                           # (TB, D_PAD) f32, pad lanes zero

    # --- CrossNet (padded lanes stay exactly zero) ---
    xl = x0
    for i in range(L):                                         # static layer loop
        w = cw_ref[i, :][None, :]                              # (1, D_PAD)
        xl_w = jnp.sum(xl * w, axis=1, keepdims=True)          # (B, 1)
        xl = x0 * xl_w + cb_ref[i, :][None, :] + xl

    # --- per-class MLP heads (BN folded into weights, eval mode) ---
    # Layer 1 of all C heads as one lane-dense bf16 matmul: (TB,128) @ (128, C*256).
    # TODO(synk): BatchNorm1d / Dropout are implemented in eval mode (running stats
    # identity, dropout off); training-mode batch statistics are not reproduced.
    xl_b = xl.astype(jnp.bfloat16)
    h1 = jnp.dot(xl_b, w1_ref[...], preferred_element_type=jnp.float32)
    h1 = jnp.maximum(h1 + b1_ref[...], 0.0)                    # (TB, C*H1P)
    h1_b = h1.astype(jnp.bfloat16)

    cols = []
    for c in range(C):                                         # C = 3, static unroll
        hc = h1_b[:, c * H1P:(c + 1) * H1P]                    # (TB, H1P) lane-aligned slice
        h2 = jnp.dot(hc, w2_ref[c], preferred_element_type=jnp.float32)
        h2 = jnp.maximum(h2 + b2_ref[c][None, :], 0.0)         # (TB, H2P)
        o = jnp.sum(h2 * w3_ref[c][None, :], axis=1, keepdims=True) + b3_ref[c][None, :]
        cols.append(o)                                         # (TB, 1)
    cols.append(jnp.zeros((tb, OUT_PAD - C), jnp.float32))     # lane-dense padding
    out_ref[...] = jax.nn.sigmoid(jnp.concatenate(cols, axis=1))   # (TB, OUT_PAD)


def dcn_forward(x0, p):
    bp = x0.shape[0]                                           # already a multiple of tb
    tb = min(MAX_TB, bp)

    def const2(i):
        return (0, 0)

    def const3(i):
        return (0, 0, 0)

    return pl.pallas_call(
        dcn_fused_kernel,
        out_shape=jax.ShapeDtypeStruct((bp, OUT_PAD), jnp.float32),
        grid=(bp // tb,),
        in_specs=[
            pl.BlockSpec((tb, D_PAD), lambda i: (i, 0)),       # x0: batch-tiled
            pl.BlockSpec((L, D_PAD), const2),                  # cross kernels (resident)
            pl.BlockSpec((L, D_PAD), const2),                  # cross bias
            pl.BlockSpec((D_PAD, C * H1P), const2),            # fused layer-1 weights (bf16)
            pl.BlockSpec((1, C * H1P), const2),                # fused layer-1 bias
            pl.BlockSpec((C, H1P, H2P), const3),               # per-head layer-2 weights (bf16)
            pl.BlockSpec((C, H2P), const2),                    # per-head layer-2 bias
            pl.BlockSpec((C, H2P), const2),                    # per-head layer-3 weights
            pl.BlockSpec((C, 1), const2),                      # per-head layer-3 bias
        ],
        out_specs=pl.BlockSpec((tb, OUT_PAD), lambda i: (i, 0)),
        compiler_params=pltpu.CompilerParams(
            dimension_semantics=("parallel",)),
    )(x0, p["cross_w"], p["cross_b"],
      p["w1"], p["b1"], p["w2"], p["b2"], p["w3"], p["b3"])


# ---------------- parameter init (deterministic, in-script) -------------------
def _pad2(w, rows, cols):
    return jnp.zeros((rows, cols), jnp.float32).at[: w.shape[0], : w.shape[1]].set(w)


def _pad1(v, n):
    return jnp.zeros((n,), jnp.float32).at[: v.shape[0]].set(v)


def init_params(key):
    keys = iter(jax.random.split(key, 16))

    def xavier(k, fan_in, fan_out, shape):
        std = (2.0 / (fan_in + fan_out)) ** 0.5
        return std * jax.random.normal(k, shape, jnp.float32)

    params = {}
    # embedding tables (nn.Embedding weights ~ N(0, 1e-4))
    params["emb_userid"] = 1e-4 * jax.random.normal(next(keys), (VOCABS["userid"], E), jnp.float32)
    # TODO(synk): pretrained feed embedding (.npy) replaced by deterministic random init.
    params["emb_feedid"] = 2e-2 * jax.random.normal(next(keys), (VOCABS["feedid"], E), jnp.float32)
    params["emb_authorid"] = 1e-4 * jax.random.normal(next(keys), (VOCABS["authorid"], E), jnp.float32)

    # CrossNet: kernels (D,1) xavier_normal, bias zeros -> stored (L, D_PAD), zero-padded.
    cw = xavier(next(keys), D, 1, (L, D))
    params["cross_w"] = jnp.pad(cw, ((0, 0), (0, D_PAD - D)))
    params["cross_b"] = jnp.zeros((L, D_PAD), jnp.float32)

    # One FullyConnectedLayer; the C output heads are deepcopies => identical weights.
    w1 = xavier(next(keys), D, H1, (D, H1))
    w2 = xavier(next(keys), H1, H2, (H1, H2))
    w3 = xavier(next(keys), H2, 1, (H2,))
    b1 = jnp.zeros((H1,), jnp.float32)
    b2 = jnp.zeros((H2,), jnp.float32)
    b3 = jnp.zeros((1,), jnp.float32)

    # Fold BatchNorm1d (eval): y = (h - mean)/sqrt(var+eps)*gamma + beta with
    # running stats identity -> scale = 1/sqrt(1+eps), shift = 0. Folded into
    # the preceding linear: W' = W*scale, b' = b*scale + shift.
    bn_scale = (1.0 + BN_EPS) ** -0.5
    w1f, b1f = w1 * bn_scale, b1 * bn_scale
    w2f, b2f = w2 * bn_scale, b2 * bn_scale

    # Pack layer-1 of all C heads into a single lane-dense bf16 matmul:
    #   (D_PAD, C*H1P) with zero-padded K rows and 256-wide per-head lane blocks.
    w1p = _pad2(w1f, D_PAD, H1P)
    params["w1"] = jnp.concatenate([w1p] * C, axis=1).astype(jnp.bfloat16)   # (D_PAD, C*H1P)
    params["b1"] = jnp.tile(_pad1(b1f, H1P), C)[None, :]                      # (1, C*H1P) f32

    # Layers 2/3, padded; stacked on the class axis. Layer-2 weights in bf16.
    w2p = _pad2(w2f, H1P, H2P)
    params["w2"] = (jnp.broadcast_to(w2p[None], (C, H1P, H2P)) + 0.0).astype(jnp.bfloat16)
    params["b2"] = jnp.broadcast_to(_pad1(b2f, H2P)[None], (C, H2P)) + 0.0
    params["w3"] = jnp.broadcast_to(_pad1(w3, H2P)[None], (C, H2P)) + 0.0
    params["b3"] = jnp.broadcast_to(b3[None], (C, 1)) + 0.0
    return params


# ---------------- forward (JAX gather/interaction glue + ONE Pallas kernel) ----
def model_forward(params, dense_features, single_id_concat, multi_id_concat, mask_concat):
    # mask_concat is accepted but unused, exactly like the PyTorch forward.
    del mask_concat
    tables = [params["emb_userid"], params["emb_feedid"], params["emb_authorid"]]

    # single-id gathers (userid, feedid, authorid) — also the interaction partners
    # of the three multi-id sequence features (same index).
    single_embs = [tables[i][single_id_concat[:, 0, i]].astype(jnp.float32)
                   for i in range(N_SINGLE)]                            # (B, E) each

    # multi-feature interaction + max over sequence, done in XLA (fuses with gathers)
    parts = list(single_embs)
    for f in range(N_MULTI):
        se = single_embs[f][:, None, :]                                 # (B, 1, E)
        m = tables[f][multi_id_concat[:, :, f]].astype(jnp.float32)     # (B, S, E)
        parts.append(jnp.max(m, axis=1))                                # max_seq emb
        parts.append(jnp.max(se - m, axis=1))                           # max_seq (single - emb)
        parts.append(jnp.max(se * m, axis=1))                           # max_seq (single * emb)
    parts.append(dense_features.astype(jnp.float32))
    x0 = jnp.concatenate(parts, axis=1)                                 # (B, D)

    bsz = x0.shape[0]
    tb = min(MAX_TB, _round_up(bsz, 8))
    b_pad = _round_up(bsz, tb)
    x0 = jnp.pad(x0, ((0, b_pad - bsz), (0, D_PAD - D)))                # (B_pad, D_PAD)

    out = dcn_forward(x0, params)                                       # (B_pad, OUT_PAD)
    return out[:bsz, :C]                                                # (B, C)


if __name__ == "__main__":
    key = jax.random.PRNGKey(0)
    kp, kd, ks, km, kmask = jax.random.split(key, 5)
    params = init_params(kp)

    dense = jax.random.normal(kd, (B, N_DENSE), jnp.float32)
    max_id = min(VOCABS.values())
    single_ids = jax.random.randint(ks, (B, 1, N_SINGLE), 0, max_id, dtype=jnp.int32)
    multi_ids = jax.random.randint(km, (B, S, N_MULTI), 0, max_id, dtype=jnp.int32)
    mask = (jax.random.uniform(kmask, (B, S, N_MULTI)) > 0.5).astype(jnp.float32)

    fwd = jax.jit(model_forward)
    out = fwd(params, dense, single_ids, multi_ids, mask)
    out = jax.block_until_ready(out)
    assert out.shape == (B, C), out.shape
    assert bool(jnp.all(jnp.isfinite(out)))
    print("KERNEL_OK")
</pallas_src>

<mosaic_0001>
module attributes {stable_mosaic.version = 11 : i64} {
  func.func @dcn_fused_kernel(%arg0: i32, %arg1: memref<8x128xf32, #tpu.memory_space<vmem>>, %arg2: memref<2x128xf32, #tpu.memory_space<vmem>>, %arg3: memref<2x128xf32, #tpu.memory_space<vmem>>, %arg4: memref<128x768xbf16, #tpu.memory_space<vmem>>, %arg5: memref<1x768xf32, #tpu.memory_space<vmem>>, %arg6: memref<3x256x128xbf16, #tpu.memory_space<vmem>>, %arg7: memref<3x128xf32, #tpu.memory_space<vmem>>, %arg8: memref<3x128xf32, #tpu.memory_space<vmem>>, %arg9: memref<3x1xf32, #tpu.memory_space<vmem>>, %arg10: memref<8x128xf32, #tpu.memory_space<vmem>>) attributes {dimension_semantics = [#tpu.dimension_semantics<parallel>], iteration_bounds = array<i64: 1>, scalar_prefetch = 0 : i64, scratch_operands = 0 : i64, tpu.core_type = #tpu.core_type<tc>, window_params = [{transform_indices = @transform_0, window_bounds = array<i64: 8, 128>}, {pipeline_mode = #tpu.pipeline_mode<synchronous>, transform_indices = @transform_1, window_bounds = array<i64: 2, 128>}, {pipeline_mode = #tpu.pipeline_mode<synchronous>, transform_indices = @transform_2, window_bounds = array<i64: 2, 128>}, {pipeline_mode = #tpu.pipeline_mode<synchronous>, transform_indices = @transform_3, window_bounds = array<i64: 128, 768>}, {pipeline_mode = #tpu.pipeline_mode<synchronous>, transform_indices = @transform_4, window_bounds = array<i64: 1, 768>}, {pipeline_mode = #tpu.pipeline_mode<synchronous>, transform_indices = @transform_5, window_bounds = array<i64: 3, 256, 128>}, {pipeline_mode = #tpu.pipeline_mode<synchronous>, transform_indices = @transform_6, window_bounds = array<i64: 3, 128>}, {pipeline_mode = #tpu.pipeline_mode<synchronous>, transform_indices = @transform_7, window_bounds = array<i64: 3, 128>}, {pipeline_mode = #tpu.pipeline_mode<synchronous>, transform_indices = @transform_8, window_bounds = array<i64: 3, 1>}, {transform_indices = @transform_9, window_bounds = array<i64: 8, 128>}]} {
    %c0 = arith.constant 0 : index
    %c0_0 = arith.constant 0 : index
    %0 = vector.load %arg1[%c0, %c0_0] : memref<8x128xf32, #tpu.memory_space<vmem>>, vector<8x128xf32>
    %c0_1 = arith.constant 0 : index
    %c0_2 = arith.constant 0 : index
    %1 = vector.load %arg2[%c0_1, %c0_2] : memref<2x128xf32, #tpu.memory_space<vmem>>, vector<1x128xf32>
    %2 = vector.shape_cast %1 : vector<1x128xf32> to vector<128xf32>
    %3 = vector.shape_cast %2 : vector<128xf32> to vector<1x128xf32>
    %4 = vector.broadcast %3 : vector<1x128xf32> to vector<8x128xf32>
    %5 = arith.mulf %0, %4 : vector<8x128xf32>
    %cst = arith.constant dense<0.000000e+00> : vector<8xf32>
    %6 = vector.multi_reduction <add>, %5, %cst [1] : vector<8x128xf32> to vector<8xf32>
    %7 = vector.shape_cast %6 : vector<8xf32> to vector<8x1xf32>
    %8 = vector.broadcast %7 : vector<8x1xf32> to vector<8x128xf32>
    %9 = arith.mulf %0, %8 : vector<8x128xf32>
    %c0_3 = arith.constant 0 : index
    %c0_4 = arith.constant 0 : index
    %10 = vector.load %arg3[%c0_3, %c0_4] : memref<2x128xf32, #tpu.memory_space<vmem>>, vector<1x128xf32>
    %11 = vector.shape_cast %10 : vector<1x128xf32> to vector<128xf32>
    %12 = vector.shape_cast %11 : vector<128xf32> to vector<1x128xf32>
    %13 = vector.broadcast %12 : vector<1x128xf32> to vector<8x128xf32>
    %14 = arith.addf %9, %13 : vector<8x128xf32>
    %15 = arith.addf %14, %0 : vector<8x128xf32>
    %c1 = arith.constant 1 : index
    %c0_5 = arith.constant 0 : index
    %16 = vector.load %arg2[%c1, %c0_5] : memref<2x128xf32, #tpu.memory_space<vmem>>, vector<1x128xf32>
    %17 = vector.shape_cast %16 : vector<1x128xf32> to vector<128xf32>
    %18 = vector.shape_cast %17 : vector<128xf32> to vector<1x128xf32>
    %19 = vector.broadcast %18 : vector<1x128xf32> to vector<8x128xf32>
    %20 = arith.mulf %15, %19 : vector<8x128xf32>
    %cst_6 = arith.constant dense<0.000000e+00> : vector<8xf32>
    %21 = vector.multi_reduction <add>, %20, %cst_6 [1] : vector<8x128xf32> to vector<8xf32>
    %22 = vector.shape_cast %21 : vector<8xf32> to vector<8x1xf32>
    %23 = vector.broadcast %22 : vector<8x1xf32> to vector<8x128xf32>
    %24 = arith.mulf %0, %23 : vector<8x128xf32>
    %c1_7 = arith.constant 1 : index
    %c0_8 = arith.constant 0 : index
    %25 = vector.load %arg3[%c1_7, %c0_8] : memref<2x128xf32, #tpu.memory_space<vmem>>, vector<1x128xf32>
    %26 = vector.shape_cast %25 : vector<1x128xf32> to vector<128xf32>
    %27 = vector.shape_cast %26 : vector<128xf32> to vector<1x128xf32>
    %28 = vector.broadcast %27 : vector<1x128xf32> to vector<8x128xf32>
    %29 = arith.addf %24, %28 : vector<8x128xf32>
    %30 = arith.addf %29, %15 : vector<8x128xf32>
    %31 = arith.truncf %30 : vector<8x128xf32> to vector<8x128xbf16>
    %c0_9 = arith.constant 0 : index
    %c0_10 = arith.constant 0 : index
    %32 = vector.load %arg4[%c0_9, %c0_10] : memref<128x768xbf16, #tpu.memory_space<vmem>>, vector<128x768xbf16>
    %cst_11 = arith.constant dense<0.000000e+00> : vector<8x768xf32>
    %33 = tpu.matmul %31, %32, %cst_11 {dimension_numbers = #tpu.dot_dimension_numbers<[1], [0], [0], [1], [0, 0, 1, 1], [], []>} : vector<8x128xbf16>, vector<128x768xbf16>, vector<8x768xf32> -> vector<8x768xf32>
    %c0_12 = arith.constant 0 : index
    %c0_13 = arith.constant 0 : index
    %34 = vector.load %arg5[%c0_12, %c0_13] : memref<1x768xf32, #tpu.memory_space<vmem>>, vector<1x768xf32>
    %35 = vector.broadcast %34 : vector<1x768xf32> to vector<8x768xf32>
    %36 = arith.addf %33, %35 : vector<8x768xf32>
    %cst_14 = arith.constant 0.000000e+00 : f32
    %37 = vector.broadcast %cst_14 : f32 to vector<8x768xf32>
    %38 = arith.maximumf %36, %37 : vector<8x768xf32>
    %39 = arith.truncf %38 : vector<8x768xf32> to vector<8x768xbf16>
    %40 = vector.extract_strided_slice %39 {offsets = [0, 0], sizes = [8, 256], strides = [1, 1]} : vector<8x768xbf16> to vector<8x256xbf16>
    %c0_15 = arith.constant 0 : index
    %c0_16 = arith.constant 0 : index
    %c0_17 = arith.constant 0 : index
    %41 = vector.load %arg6[%c0_15, %c0_16, %c0_17] : memref<3x256x128xbf16, #tpu.memory_space<vmem>>, vector<1x256x128xbf16>
    %42 = vector.shape_cast %41 : vector<1x256x128xbf16> to vector<256x128xbf16>
    %cst_18 = arith.constant dense<0.000000e+00> : vector<8x128xf32>
    %43 = tpu.matmul %40, %42, %cst_18 {dimension_numbers = #tpu.dot_dimension_numbers<[1], [0], [0], [1], [0, 0, 1, 1], [], []>} : vector<8x256xbf16>, vector<256x128xbf16>, vector<8x128xf32> -> vector<8x128xf32>
    %c0_19 = arith.constant 0 : index
    %c0_20 = arith.constant 0 : index
    %44 = vector.load %arg7[%c0_19, %c0_20] : memref<3x128xf32, #tpu.memory_space<vmem>>, vector<1x128xf32>
    %45 = vector.shape_cast %44 : vector<1x128xf32> to vector<128xf32>
    %46 = vector.shape_cast %45 : vector<128xf32> to vector<1x128xf32>
    %47 = vector.broadcast %46 : vector<1x128xf32> to vector<8x128xf32>
    %48 = arith.addf %43, %47 : vector<8x128xf32>
    %cst_21 = arith.constant 0.000000e+00 : f32
    %49 = vector.broadcast %cst_21 : f32 to vector<8x128xf32>
    %50 = arith.maximumf %48, %49 : vector<8x128xf32>
    %c0_22 = arith.constant 0 : index
    %c0_23 = arith.constant 0 : index
    %51 = vector.load %arg8[%c0_22, %c0_23] : memref<3x128xf32, #tpu.memory_space<vmem>>, vector<1x128xf32>
    %52 = vector.shape_cast %51 : vector<1x128xf32> to vector<128xf32>
    %53 = vector.shape_cast %52 : vector<128xf32> to vector<1x128xf32>
    %54 = vector.broadcast %53 : vector<1x128xf32> to vector<8x128xf32>
    %55 = arith.mulf %50, %54 : vector<8x128xf32>
    %cst_24 = arith.constant dense<0.000000e+00> : vector<8xf32>
    %56 = vector.multi_reduction <add>, %55, %cst_24 [1] : vector<8x128xf32> to vector<8xf32>
    %57 = vector.shape_cast %56 : vector<8xf32> to vector<8x1xf32>
    %c0_25 = arith.constant 0 : index
    %c0_26 = arith.constant 0 : index
    %58 = vector.load %arg9[%c0_25, %c0_26] : memref<3x1xf32, #tpu.memory_space<vmem>>, vector<1x1xf32>
    %59 = vector.shape_cast %58 : vector<1x1xf32> to vector<1xf32>
    %60 = vector.shape_cast %59 : vector<1xf32> to vector<1x1xf32>
    %61 = vector.broadcast %60 : vector<1x1xf32> to vector<8x1xf32>
    %62 = arith.addf %57, %61 : vector<8x1xf32>
    %63 = vector.extract_strided_slice %39 {offsets = [0, 256], sizes = [8, 256], strides = [1, 1]} : vector<8x768xbf16> to vector<8x256xbf16>
    %c1_27 = arith.constant 1 : index
    %c0_28 = arith.constant 0 : index
    %c0_29 = arith.constant 0 : index
    %64 = vector.load %arg6[%c1_27, %c0_28, %c0_29] : memref<3x256x128xbf16, #tpu.memory_space<vmem>>, vector<1x256x128xbf16>
    %65 = vector.shape_cast %64 : vector<1x256x128xbf16> to vector<256x128xbf16>
    %cst_30 = arith.constant dense<0.000000e+00> : vector<8x128xf32>
    %66 = tpu.matmul %63, %65, %cst_30 {dimension_numbers = #tpu.dot_dimension_numbers<[1], [0], [0], [1], [0, 0, 1, 1], [], []>} : vector<8x256xbf16>, vector<256x128xbf16>, vector<8x128xf32> -> vector<8x128xf32>
    %c1_31 = arith.constant 1 : index
    %c0_32 = arith.constant 0 : index
    %67 = vector.load %arg7[%c1_31, %c0_32] : memref<3x128xf32, #tpu.memory_space<vmem>>, vector<1x128xf32>
    %68 = vector.shape_cast %67 : vector<1x128xf32> to vector<128xf32>
    %69 = vector.shape_cast %68 : vector<128xf32> to vector<1x128xf32>
    %70 = vector.broadcast %69 : vector<1x128xf32> to vector<8x128xf32>
    %71 = arith.addf %66, %70 : vector<8x128xf32>
    %cst_33 = arith.constant 0.000000e+00 : f32
    %72 = vector.broadcast %cst_33 : f32 to vector<8x128xf32>
    %73 = arith.maximumf %71, %72 : vector<8x128xf32>
    %c1_34 = arith.constant 1 : index
    %c0_35 = arith.constant 0 : index
    %74 = vector.load %arg8[%c1_34, %c0_35] : memref<3x128xf32, #tpu.memory_space<vmem>>, vector<1x128xf32>
    %75 = vector.shape_cast %74 : vector<1x128xf32> to vector<128xf32>
    %76 = vector.shape_cast %75 : vector<128xf32> to vector<1x128xf32>
    %77 = vector.broadcast %76 : vector<1x128xf32> to vector<8x128xf32>
    %78 = arith.mulf %73, %77 : vector<8x128xf32>
    %cst_36 = arith.constant dense<0.000000e+00> : vector<8xf32>
    %79 = vector.multi_reduction <add>, %78, %cst_36 [1] : vector<8x128xf32> to vector<8xf32>
    %80 = vector.shape_cast %79 : vector<8xf32> to vector<8x1xf32>
    %c1_37 = arith.constant 1 : index
    %c0_38 = arith.constant 0 : index
    %81 = vector.load %arg9[%c1_37, %c0_38] : memref<3x1xf32, #tpu.memory_space<vmem>>, vector<1x1xf32>
    %82 = vector.shape_cast %81 : vector<1x1xf32> to vector<1xf32>
    %83 = vector.shape_cast %82 : vector<1xf32> to vector<1x1xf32>
    %84 = vector.broadcast %83 : vector<1x1xf32> to vector<8x1xf32>
    %85 = arith.addf %80, %84 : vector<8x1xf32>
    %86 = vector.extract_strided_slice %39 {offsets = [0, 512], sizes = [8, 256], strides = [1, 1]} : vector<8x768xbf16> to vector<8x256xbf16>
    %c2 = arith.constant 2 : index
    %c0_39 = arith.constant 0 : index
    %c0_40 = arith.constant 0 : index
    %87 = vector.load %arg6[%c2, %c0_39, %c0_40] : memref<3x256x128xbf16, #tpu.memory_space<vmem>>, vector<1x256x128xbf16>
    %88 = vector.shape_cast %87 : vector<1x256x128xbf16> to vector<256x128xbf16>
    %cst_41 = arith.constant dense<0.000000e+00> : vector<8x128xf32>
    %89 = tpu.matmul %86, %88, %cst_41 {dimension_numbers = #tpu.dot_dimension_numbers<[1], [0], [0], [1], [0, 0, 1, 1], [], []>} : vector<8x256xbf16>, vector<256x128xbf16>, vector<8x128xf32> -> vector<8x128xf32>
    %c2_42 = arith.constant 2 : index
    %c0_43 = arith.constant 0 : index
    %90 = vector.load %arg7[%c2_42, %c0_43] : memref<3x128xf32, #tpu.memory_space<vmem>>, vector<1x128xf32>
    %91 = vector.shape_cast %90 : vector<1x128xf32> to vector<128xf32>
    %92 = vector.shape_cast %91 : vector<128xf32> to vector<1x128xf32>
    %93 = vector.broadcast %92 : vector<1x128xf32> to vector<8x128xf32>
    %94 = arith.addf %89, %93 : vector<8x128xf32>
    %cst_44 = arith.constant 0.000000e+00 : f32
    %95 = vector.broadcast %cst_44 : f32 to vector<8x128xf32>
    %96 = arith.maximumf %94, %95 : vector<8x128xf32>
    %c2_45 = arith.constant 2 : index
    %c0_46 = arith.constant 0 : index
    %97 = vector.load %arg8[%c2_45, %c0_46] : memref<3x128xf32, #tpu.memory_space<vmem>>, vector<1x128xf32>
    %98 = vector.shape_cast %97 : vector<1x128xf32> to vector<128xf32>
    %99 = vector.shape_cast %98 : vector<128xf32> to vector<1x128xf32>
    %100 = vector.broadcast %99 : vector<1x128xf32> to vector<8x128xf32>
    %101 = arith.mulf %96, %100 : vector<8x128xf32>
    %cst_47 = arith.constant dense<0.000000e+00> : vector<8xf32>
    %102 = vector.multi_reduction <add>, %101, %cst_47 [1] : vector<8x128xf32> to vector<8xf32>
    %103 = vector.shape_cast %102 : vector<8xf32> to vector<8x1xf32>
    %c2_48 = arith.constant 2 : index
    %c0_49 = arith.constant 0 : index
    %104 = vector.load %arg9[%c2_48, %c0_49] : memref<3x1xf32, #tpu.memory_space<vmem>>, vector<1x1xf32>
    %105 = vector.shape_cast %104 : vector<1x1xf32> to vector<1xf32>
    %106 = vector.shape_cast %105 : vector<1xf32> to vector<1x1xf32>
    %107 = vector.broadcast %106 : vector<1x1xf32> to vector<8x1xf32>
    %108 = arith.addf %103, %107 : vector<8x1xf32>
    %cst_50 = arith.constant 0.000000e+00 : f32
    %109 = vector.broadcast %cst_50 : f32 to vector<8x125xf32>
    %110 = tpu.concatenate %62, %85, %108, %109 in 1 : vector<8x1xf32>, vector<8x1xf32>, vector<8x1xf32>, vector<8x125xf32> -> vector<8x128xf32>
    %111 = arith.negf %110 : vector<8x128xf32>
    %112 = math.exp %111 : vector<8x128xf32>
    %cst_51 = arith.constant 1.000000e+00 : f32
    %113 = vector.broadcast %cst_51 : f32 to vector<8x128xf32>
    %114 = arith.addf %113, %112 : vector<8x128xf32>
    %115 = arith.divf %113, %114 : vector<8x128xf32>
    %c0_52 = arith.constant 0 : index
    %c0_53 = arith.constant 0 : index
    %116 = vector.load %arg10[%c0_52, %c0_53] : memref<8x128xf32, #tpu.memory_space<vmem>>, vector<8x128xf32>
    tpu.vector_store %arg10[%c0_52, %c0_53], %115 {strides = array<i32>} : memref<8x128xf32, #tpu.memory_space<vmem>>, vector<8x128xf32>,
    return
  }
  func.func @transform_0(%arg0: i32) -> (i32, i32) {
    %c0_i32 = arith.constant 0 : i32
    %c0_i32_0 = arith.constant 0 : i32
    return %arg0, %c0_i32 : i32, i32
  }
  func.func @transform_1(%arg0: i32) -> (i32, i32) {
    %c0_i32 = arith.constant 0 : i32
    %c0_i32_0 = arith.constant 0 : i32
    %c0_i32_1 = arith.constant 0 : i32
    return %c0_i32, %c0_i32_0 : i32, i32
  }
  func.func @transform_2(%arg0: i32) -> (i32, i32) {
    %c0_i32 = arith.constant 0 : i32
    %c0_i32_0 = arith.constant 0 : i32
    %c0_i32_1 = arith.constant 0 : i32
    return %c0_i32, %c0_i32_0 : i32, i32
  }
  func.func @transform_3(%arg0: i32) -> (i32, i32) {
    %c0_i32 = arith.constant 0 : i32
    %c0_i32_0 = arith.constant 0 : i32
    %c0_i32_1 = arith.constant 0 : i32
    return %c0_i32, %c0_i32_0 : i32, i32
  }
  func.func @transform_4(%arg0: i32) -> (i32, i32) {
    %c0_i32 = arith.constant 0 : i32
    %c0_i32_0 = arith.constant 0 : i32
    %c0_i32_1 = arith.constant 0 : i32
    return %c0_i32, %c0_i32_0 : i32, i32
  }
  func.func @transform_5(%arg0: i32) -> (i32, i32, i32) {
    %c0_i32 = arith.constant 0 : i32
    %c0_i32_0 = arith.constant 0 : i32
    %c0_i32_1 = arith.constant 0 : i32
    %c0_i32_2 = arith.constant 0 : i32
    return %c0_i32, %c0_i32_0, %c0_i32_1 : i32, i32, i32
  }
  func.func @transform_6(%arg0: i32) -> (i32, i32) {
    %c0_i32 = arith.constant 0 : i32
    %c0_i32_0 = arith.constant 0 : i32
    %c0_i32_1 = arith.constant 0 : i32
    return %c0_i32, %c0_i32_0 : i32, i32
  }
  func.func @transform_7(%arg0: i32) -> (i32, i32) {
    %c0_i32 = arith.constant 0 : i32
    %c0_i32_0 = arith.constant 0 : i32
    %c0_i32_1 = arith.constant 0 : i32
    return %c0_i32, %c0_i32_0 : i32, i32
  }
  func.func @transform_8(%arg0: i32) -> (i32, i32) {
    %c0_i32 = arith.constant 0 : i32
    %c0_i32_0 = arith.constant 0 : i32
    %c0_i32_1 = arith.constant 0 : i32
    return %c0_i32, %c0_i32_0 : i32, i32
  }
  func.func @transform_9(%arg0: i32) -> (i32, i32) {
    %c0_i32 = arith.constant 0 : i32
    %c0_i32_0 = arith.constant 0 : i32
    return %arg0, %c0_i32 : i32, i32
  }
}

</mosaic_0001>

<llo_original>
// kernel: model_forward.1
$region0: #{model_forward.1}
  #allocation0 [shape = 'u32[]', space=smem, size = 0x4, offset = 0x4, fixed_abs, tag = 'smem constant byte address 0x4 - core index']
  #allocation1 [shape = 'u32[144,128]{1,0:T(1,128)}', space=vmem, size = 0x12000, scoped, tag = 'internal scratch']
  %s0 = inlined_call_operand.vmem [shape: f32[8,128], index: 0, kind: input, shape index: {}]
  %s1 = inlined_call_operand.vmem [shape: f32[2,128], index: 1, kind: input, shape index: {}]
  %s2 = inlined_call_operand.vmem [shape: f32[2,128], index: 2, kind: input, shape index: {}]
  %s3 = inlined_call_operand.vmem [shape: bf16[128,768], index: 3, kind: input, shape index: {}]
  %s4 = inlined_call_operand.vmem [shape: f32[1,768], index: 4, kind: input, shape index: {}]
  %s5 = inlined_call_operand.vmem [shape: bf16[3,256,128], index: 5, kind: input, shape index: {}]
  %s6 = inlined_call_operand.vmem [shape: f32[3,128], index: 6, kind: input, shape index: {}]
  %s7 = inlined_call_operand.vmem [shape: f32[3,128], index: 7, kind: input, shape index: {}]
  %s8 = inlined_call_operand.vmem [shape: f32[3,1], index: 8, kind: input, shape index: {}]
  %s9 = inlined_call_operand.vmem [shape: f32[8,128], index: 9, kind: output, shape index: {}]
  %s10 = sld [smem:[#allocation0]]
  $region46: #{model_forward.1} parent=0
    _
  %s12 = ssub.s32 1, %s10
  %s13 = scalar_select 0, %s12, %s10
  // Predicated region
  $region2: #{model_forward.1} parent=0 // pred_check
    _
  $region3: #{model_forward.1} parent=0 // pred_check_branch
    %15 = sbr.rel (0) target = $region5
  $region4: #{model_forward.1} parent=0 // pred_region
    _
  $region5: #{model_forward.1} parent=0 // pred_fallthru
    _
  // Predicated region
  $region6: #{model_forward.1} parent=0 // pred_check
    _
  $region7: #{model_forward.1} parent=0 // pred_check_branch
    %17 = sbr.rel (0) target = $region9
  $region8: #{model_forward.1} parent=0 // pred_region
    _
  $region9: #{model_forward.1} parent=0 // pred_fallthru
    _
  // Predicated region
  $region10: #{model_forward.1} parent=0 // pred_check
    _
  $region11: #{model_forward.1} parent=0 // pred_check_branch
    %19 = sbr.rel (0) target = $region13
  $region12: #{model_forward.1} parent=0 // pred_region
    _
  $region13: #{model_forward.1} parent=0 // pred_fallthru
    _
  // Predicated region
  $region14: #{model_forward.1} parent=0 // pred_check
    _
  $region15: #{model_forward.1} parent=0 // pred_check_branch
    %21 = sbr.rel (0) target = $region17
  $region16: #{model_forward.1} parent=0 // pred_region
    _
  $region17: #{model_forward.1} parent=0 // pred_fallthru
    _
  // Predicated region
  $region18: #{model_forward.1} parent=0 // pred_check
    _
  $region19: #{model_forward.1} parent=0 // pred_check_branch
    %23 = sbr.rel (0) target = $region21
  $region20: #{model_forward.1} parent=0 // pred_region
    _
  $region21: #{model_forward.1} parent=0 // pred_fallthru
    _
  // Predicated region
  $region22: #{model_forward.1} parent=0 // pred_check
    _
  $region23: #{model_forward.1} parent=0 // pred_check_branch
    %25 = sbr.rel (0) target = $region25
  $region24: #{model_forward.1} parent=0 // pred_region
    _
  $region25: #{model_forward.1} parent=0 // pred_fallthru
    _
  // Predicated region
  $region26: #{model_forward.1} parent=0 // pred_check
    _
  $region27: #{model_forward.1} parent=0 // pred_check_branch
    %27 = sbr.rel (0) target = $region29
  $region28: #{model_forward.1} parent=0 // pred_region
    _
  $region29: #{model_forward.1} parent=0 // pred_fallthru
    _
  // Predicated region
  $region30: #{model_forward.1} parent=0 // pred_check
    _
  $region31: #{model_forward.1} parent=0 // pred_check_branch
    %29 = sbr.rel (0) target = $region33
  $region32: #{model_forward.1} parent=0 // pred_region
    _
  $region33: #{model_forward.1} parent=0 // pred_fallthru
    _
  // Predicated region
  $region34: #{model_forward.1} parent=0 // pred_check
    _
  $region35: #{model_forward.1} parent=0 // pred_check_branch
    %31 = sbr.rel (0) target = $region37
  $region36: #{model_forward.1} parent=0 // pred_region
    _
  $region37: #{model_forward.1} parent=0 // pred_fallthru
    _
  %v33 = vld [vmem:[%s0] sm:$0xff]
  %v34 = vld [vmem:[%s1] sm:$0x1]
  %v35 = vlaneseq
  %v36 = vshrl.u32 %v35, 7
  %v37 = vsub.s32 0, %v36
  %v38 = vrot.slane %v34, %v37
  %v39 = vmul.f32 %v33, %v38
  %40 = vadd.xlane.f32.xlu0 %v39
  %v41 = vpop.xlane.xlu0 %40
  %v42 = vmul.f32 %v33, %v41
  %v43 = vld [vmem:[%s2] sm:$0x1]
  %v44 = vlaneseq
  %v45 = vshrl.u32 %v44, 7
  %v46 = vsub.s32 0, %v45
  %v47 = vrot.slane %v43, %v46
  %v48 = vadd.f32 %v42, %v47
  %v49 = vadd.f32 %v48, %v33
  %v50 = vld [vmem:[%s1 + $0x1] sm:$0x1]
  %v51 = vlaneseq
  %v52 = vshrl.u32 %v51, 7
  %v53 = vsub.s32 0, %v52
  %v54 = vrot.slane %v50, %v53
  %v55 = vmul.f32 %v49, %v54
  %56 = vadd.xlane.f32.xlu0 %v55
  %v57 = vpop.xlane.xlu0 %56
  %v58 = vmul.f32 %v33, %v57
  %v59 = vld [vmem:[%s2 + $0x1] sm:$0x1]
  %v60 = vlaneseq
  %v61 = vshrl.u32 %v60, 7
  %v62 = vsub.s32 0, %v61
  %v63 = vrot.slane %v59, %v62
  %v64 = vadd.f32 %v58, %v63
  %v65 = vadd.f32 %v64, %v49
  %v66 = vpack.c.bf16 %v65, %v65
  %v67 = vld [vmem:[%s3] sm:$0xff]
  %v68 = vld [vmem:[%s3 + $0x8] sm:$0xff]
  %v69 = vld [vmem:[%s3 + $0x10] sm:$0xff]
  %v70 = vld [vmem:[%s3 + $0x18] sm:$0xff]
  %v71 = vld [vmem:[%s3 + $0x20] sm:$0xff]
  %v72 = vld [vmem:[%s3 + $0x28] sm:$0xff]
  %v73 = vld [vmem:[%s3 + $0x30] sm:$0xff]
  %v74 = vld [vmem:[%s3 + $0x38] sm:$0xff]
  %v75 = vld [vmem:[%s3 + $0x40] sm:$0xff]
  %v76 = vld [vmem:[%s3 + $0x48] sm:$0xff]
  %v77 = vld [vmem:[%s3 + $0x50] sm:$0xff]
  %v78 = vld [vmem:[%s3 + $0x58] sm:$0xff]
  %v79 = vld [vmem:[%s3 + $0x60] sm:$0xff]
  %v80 = vld [vmem:[%s3 + $0x68] sm:$0xff]
  %v81 = vld [vmem:[%s3 + $0x70] sm:$0xff]
  %v82 = vld [vmem:[%s3 + $0x78] sm:$0xff]
  %v83 = vld [vmem:[%s3 + $0x80] sm:$0xff]
  %v84 = vld [vmem:[%s3 + $0x88] sm:$0xff]
  %v85 = vld [vmem:[%s3 + $0x90] sm:$0xff]
  %v86 = vld [vmem:[%s3 + $0x98] sm:$0xff]
  %v87 = vld [vmem:[%s3 + $0xa0] sm:$0xff]
  %v88 = vld [vmem:[%s3 + $0xa8] sm:$0xff]
  %v89 = vld [vmem:[%s3 + $0xb0] sm:$0xff]
  %v90 = vld [vmem:[%s3 + $0xb8] sm:$0xff]
  %v91 = vld [vmem:[%s3 + $0xc0] sm:$0xff]
  %v92 = vld [vmem:[%s3 + $0xc8] sm:$0xff]
  %v93 = vld [vmem:[%s3 + $0xd0] sm:$0xff]
  %v94 = vld [vmem:[%s3 + $0xd8] sm:$0xff]
  %v95 = vld [vmem:[%s3 + $0xe0] sm:$0xff]
  %v96 = vld [vmem:[%s3 + $0xe8] sm:$0xff]
  %v97 = vld [vmem:[%s3 + $0xf0] sm:$0xff]
  %v98 = vld [vmem:[%s3 + $0xf8] sm:$0xff]
  %v99 = vld [vmem:[%s3 + $0x100] sm:$0xff]
  %v100 = vld [vmem:[%s3 + $0x108] sm:$0xff]
  %v101 = vld [vmem:[%s3 + $0x110] sm:$0xff]
  %v102 = vld [vmem:[%s3 + $0x118] sm:$0xff]
  %v103 = vld [vmem:[%s3 + $0x120] sm:$0xff]
  %v104 = vld [vmem:[%s3 + $0x128] sm:$0xff]
  %v105 = vld [vmem:[%s3 + $0x130] sm:$0xff]
  %v106 = vld [vmem:[%s3 + $0x138] sm:$0xff]
  %v107 = vld [vmem:[%s3 + $0x140] sm:$0xff]
  %v108 = vld [vmem:[%s3 + $0x148] sm:$0xff]
  %v109 = vld [vmem:[%s3 + $0x150] sm:$0xff]
  %v110 = vld [vmem:[%s3 + $0x158] sm:$0xff]
  %v111 = vld [vmem:[%s3 + $0x160] sm:$0xff]
  %v112 = vld [vmem:[%s3 + $0x168] sm:$0xff]
  %v113 = vld [vmem:[%s3 + $0x170] sm:$0xff]
  %v114 = vld [vmem:[%s3 + $0x178] sm:$0xff]
  %v115 = vld [vmem:[%s4] sm:$0x3f]
  %v117 = vlaneseq
  %v118 = vshrl.u32 %v117, 7
  %v119 = vsub.s32 0, %v118
  %v120 = vrot.slane %v115, %v119
  %v121 = vlaneseq
  %v122 = vshrl.u32 %v121, 7
  %v123 = vsub.s32 1, %v122
  %v124 = vrot.slane %v115, %v123
  %v125 = vlaneseq
  %v126 = vshrl.u32 %v125, 7
  %v127 = vsub.s32 2, %v126
  %v128 = vrot.slane %v115, %v127
  %v129 = vlaneseq
  %v130 = vshrl.u32 %v129, 7
  %v131 = vsub.s32 3, %v130
  %v132 = vrot.slane %v115, %v131
  %v133 = vlaneseq
  %v134 = vshrl.u32 %v133, 7
  %v135 = vsub.s32 4, %v134
  %v136 = vrot.slane %v115, %v135
  %v137 = vlaneseq
  %v138 = vshrl.u32 %v137, 7
  %v139 = vsub.s32 5, %v138
  %v140 = vrot.slane %v115, %v139
  %v195 = vunpack.c.l.b16 %v67
  %v196 = vunpack.c.h.b16 %v67
  %v197 = vunpack.c.l.b16 %v68
  %v198 = vunpack.c.h.b16 %v68
  %v199 = vunpack.c.l.b16 %v69
  %v200 = vunpack.c.h.b16 %v69
  %v201 = vunpack.c.l.b16 %v70
  %v202 = vunpack.c.h.b16 %v70
  %v203 = vunpack.c.l.b16 %v71
  %v204 = vunpack.c.h.b16 %v71
  %v205 = vunpack.c.l.b16 %v72
  %v206 = vunpack.c.h.b16 %v72
  %v207 = vunpack.c.l.b16 %v73
  %v208 = vunpack.c.h.b16 %v73
  %v209 = vunpack.c.l.b16 %v74
  %v210 = vunpack.c.h.b16 %v74
  %v211 = vunpack.c.l.b16 %v75
  %v212 = vunpack.c.h.b16 %v75
  %v213 = vunpack.c.l.b16 %v76
  %v214 = vunpack.c.h.b16 %v76
  %v215 = vunpack.c.l.b16 %v77
  %v216 = vunpack.c.h.b16 %v77
  %v217 = vunpack.c.l.b16 %v78
  %v218 = vunpack.c.h.b16 %v78
  %v219 = vunpack.c.l.b16 %v79
  %v220 = vunpack.c.h.b16 %v79
  %v221 = vunpack.c.l.b16 %v80
  %v222 = vunpack.c.h.b16 %v80
  %v223 = vunpack.c.l.b16 %v81
  %v224 = vunpack.c.h.b16 %v81
  %v225 = vunpack.c.l.b16 %v82
  %v226 = vunpack.c.h.b16 %v82
  %v227 = vunpack.c.l.b16 %v83
  %v228 = vunpack.c.h.b16 %v83
  %v229 = vunpack.c.l.b16 %v84
  %v230 = vunpack.c.h.b16 %v84
  %v231 = vunpack.c.l.b16 %v85
  %v232 = vunpack.c.h.b16 %v85
  %v233 = vunpack.c.l.b16 %v86
  %v234 = vunpack.c.h.b16 %v86
  %v235 = vunpack.c.l.b16 %v87
  %v236 = vunpack.c.h.b16 %v87
  %v237 = vunpack.c.l.b16 %v88
  %v238 = vunpack.c.h.b16 %v88
  %v239 = vunpack.c.l.b16 %v89
  %v240 = vunpack.c.h.b16 %v89
  %v241 = vunpack.c.l.b16 %v90
  %v242 = vunpack.c.h.b16 %v90
  %v243 = vunpack.c.l.b16 %v91
  %v244 = vunpack.c.h.b16 %v91
  %v245 = vunpack.c.l.b16 %v92
  %v246 = vunpack.c.h.b16 %v92
  %v247 = vunpack.c.l.b16 %v93
  %v248 = vunpack.c.h.b16 %v93
  %v249 = vunpack.c.l.b16 %v94
  %v250 = vunpack.c.h.b16 %v94
  %v251 = vunpack.c.l.b16 %v95
  %v252 = vunpack.c.h.b16 %v95
  %v253 = vunpack.c.l.b16 %v96
  %v254 = vunpack.c.h.b16 %v96
  %v255 = vunpack.c.l.b16 %v97
  %v256 = vunpack.c.h.b16 %v97
  %v257 = vunpack.c.l.b16 %v98
  %v258 = vunpack.c.h.b16 %v98
  %v259 = vunpack.c.l.b16 %v99
  %v260 = vunpack.c.h.b16 %v99
  %v261 = vunpack.c.l.b16 %v100
  %v262 = vunpack.c.h.b16 %v100
  %v263 = vunpack.c.l.b16 %v101
  %v264 = vunpack.c.h.b16 %v101
  %v265 = vunpack.c.l.b16 %v102
  %v266 = vunpack.c.h.b16 %v102
  %v267 = vunpack.c.l.b16 %v103
  %v268 = vunpack.c.h.b16 %v103
  %v269 = vunpack.c.l.b16 %v104
  %v270 = vunpack.c.h.b16 %v104
  %v271 = vunpack.c.l.b16 %v105
  %v272 = vunpack.c.h.b16 %v105
  %v273 = vunpack.c.l.b16 %v106
  %v274 = vunpack.c.h.b16 %v106
  %v275 = vunpack.c.l.b16 %v107
  %v276 = vunpack.c.h.b16 %v107
  %v277 = vunpack.c.l.b16 %v108
  %v278 = vunpack.c.h.b16 %v108
  %v279 = vunpack.c.l.b16 %v109
  %v280 = vunpack.c.h.b16 %v109
  %v281 = vunpack.c.l.b16 %v110
  %v282 = vunpack.c.h.b16 %v110
  %v283 = vunpack.c.l.b16 %v111
  %v284 = vunpack.c.h.b16 %v111
  %v285 = vunpack.c.l.b16 %v112
  %v286 = vunpack.c.h.b16 %v112
  %v287 = vunpack.c.l.b16 %v113
  %v288 = vunpack.c.h.b16 %v113
  %v289 = vunpack.c.l.b16 %v114
  %v290 = vunpack.c.h.b16 %v114
  %v291 = vpack.c.b16 %v201, %v195
  %v292 = vpack.c.b16 %v202, %v196
  %v293 = vpack.c.b16 %v203, %v197
  %v294 = vpack.c.b16 %v204, %v198
  %v295 = vpack.c.b16 %v205, %v199
  %v296 = vpack.c.b16 %v206, %v200
  %v297 = vpack.c.b16 %v213, %v207
  %v298 = vpack.c.b16 %v214, %v208
  %v299 = vpack.c.b16 %v215, %v209
  %v300 = vpack.c.b16 %v216, %v210
  %v301 = vpack.c.b16 %v217, %v211
  %v302 = vpack.c.b16 %v218, %v212
  %v303 = vpack.c.b16 %v225, %v219
  %v304 = vpack.c.b16 %v226, %v220
  %v305 = vpack.c.b16 %v227, %v221
  %v306 = vpack.c.b16 %v228, %v222
  %v307 = vpack.c.b16 %v229, %v223
  %v308 = vpack.c.b16 %v230, %v224
  %v309 = vpack.c.b16 %v237, %v231
  %v310 = vpack.c.b16 %v238, %v232
  %v311 = vpack.c.b16 %v239, %v233
  %v312 = vpack.c.b16 %v240, %v234
  %v313 = vpack.c.b16 %v241, %v235
  %v314 = vpack.c.b16 %v242, %v236
  %v315 = vpack.c.b16 %v249, %v243
  %v316 = vpack.c.b16 %v250, %v244
  %v317 = vpack.c.b16 %v251, %v245
  %v318 = vpack.c.b16 %v252, %v246
  %v319 = vpack.c.b16 %v253, %v247
  %v320 = vpack.c.b16 %v254, %v248
  %v321 = vpack.c.b16 %v261, %v255
  %v322 = vpack.c.b16 %v262, %v256
  %v323 = vpack.c.b16 %v263, %v257
  %v324 = vpack.c.b16 %v264, %v258
  %v325 = vpack.c.b16 %v265, %v259
  %v326 = vpack.c.b16 %v266, %v260
  %v327 = vpack.c.b16 %v273, %v267
  %v328 = vpack.c.b16 %v274, %v268
  %v329 = vpack.c.b16 %v275, %v269
  %v330 = vpack.c.b16 %v276, %v270
  %v331 = vpack.c.b16 %v277, %v271
  %v332 = vpack.c.b16 %v278, %v272
  %v333 = vpack.c.b16 %v285, %v279
  %v334 = vpack.c.b16 %v286, %v280
  %v335 = vpack.c.b16 %v287, %v281
  %v336 = vpack.c.b16 %v288, %v282
  %v337 = vpack.c.b16 %v289, %v283
  %v338 = vpack.c.b16 %v290, %v284
  %387 = vmatprep.subr.bf16.mxu0 %v292
  %388 = vmatpush1.bf16.msra.mxu0 %v291
  %389 = vmatprep.subr.bf16.mxu0 %v298
  %390 = vmatpush1.bf16.msra.mxu0 %v297
  %391 = vmatprep.subr.bf16.mxu0 %v304
  %392 = vmatpush1.bf16.msra.mxu0 %v303
  %393 = vmatprep.subr.bf16.mxu0 %v310
  %394 = vmatpush1.bf16.msra.mxu0 %v309
  %395 = vmatprep.subr.bf16.mxu0 %v316
  %396 = vmatpush1.bf16.msra.mxu0 %v315
  %397 = vmatprep.subr.bf16.mxu0 %v322
  %398 = vmatpush1.bf16.msra.mxu0 %v321
  %399 = vmatprep.subr.bf16.mxu0 %v328
  %400 = vmatpush1.bf16.msra.mxu0 %v327
  %401 = vmatprep.subr.bf16.mxu0 %v334
  %402 = vmatpush1.bf16.msra.mxu0 %v333
  %403 = vmatprep.subr.bf16.mxu0 0
  %404 = vmatpush1.bf16.msra.mxu0 0
  %405 = vmatprep.subr.bf16.mxu0 0
  %406 = vmatpush1.bf16.msra.mxu0 0
  %407 = vmatprep.subr.bf16.mxu0 0
  %408 = vmatpush1.bf16.msra.mxu0 0
  %409 = vmatprep.subr.bf16.mxu0 0
  %410 = vmatpush1.bf16.msra.mxu0 0
  %411 = vmatprep.subr.bf16.mxu0 0
  %412 = vmatpush1.bf16.msra.mxu0 0
  %413 = vmatprep.subr.bf16.mxu0 0
  %414 = vmatpush1.bf16.msra.mxu0 0
  %415 = vmatprep.subr.bf16.mxu0 0
  %416 = vmatpush1.bf16.msra.mxu0 0
  %417 = vmatprep.subr.bf16.mxu0 0
  %418 = vmatpush1.bf16.msra.mxu0 0
  %419 = vmatprep.mubr.bf16.mxu0 0
  %420 = vmatmul.mubr.bf16.gmra.mrb[0].mxu0 %v66
  %v421 = vpop.f32.mrb[0].mxu0
  %v422 = vadd.f32 %v120, %v421
  %v423 = vpop.f32.mrb[0].mxu0
  %v424 = vadd.f32 %v124, %v423
  %v425 = vpop.f32.mrb[0].mxu0
  %v426 = vpop.f32.mrb[0].mxu0
  %427 = vdwg.mxu0
  %428 = vmatprep.subr.bf16.mxu0 %v294
  %429 = vmatpush1.bf16.msra.mxu0 %v293
  %430 = vmatprep.subr.bf16.mxu0 %v300
  %431 = vmatpush1.bf16.msra.mxu0 %v299
  %432 = vmatprep.subr.bf16.mxu0 %v306
  %433 = vmatpush1.bf16.msra.mxu0 %v305
  %434 = vmatprep.subr.bf16.mxu0 %v312
  %435 = vmatpush1.bf16.msra.mxu0 %v311
  %436 = vmatprep.subr.bf16.mxu0 %v318
  %437 = vmatpush1.bf16.msra.mxu0 %v317
  %438 = vmatprep.subr.bf16.mxu0 %v324
  %439 = vmatpush1.bf16.msra.mxu0 %v323
  %440 = vmatprep.subr.bf16.mxu0 %v330
  %441 = vmatpush1.bf16.msra.mxu0 %v329
  %442 = vmatprep.subr.bf16.mxu0 %v336
  %443 = vmatpush1.bf16.msra.mxu0 %v335
  %444 = vmatprep.subr.bf16.mxu0 0
  %445 = vmatpush1.bf16.msra.mxu0 0
  %446 = vmatprep.subr.bf16.mxu0 0
  %447 = vmatpush1.bf16.msra.mxu0 0
  %448 = vmatprep.subr.bf16.mxu0 0
  %449 = vmatpush1.bf16.msra.mxu0 0
  %450 = vmatprep.subr.bf16.mxu0 0
  %451 = vmatpush1.bf16.msra.mxu0 0
  %452 = vmatprep.subr.bf16.mxu0 0
  %453 = vmatpush1.bf16.msra.mxu0 0
  %454 = vmatprep.subr.bf16.mxu0 0
  %455 = vmatpush1.bf16.msra.mxu0 0
  %456 = vmatprep.subr.bf16.mxu0 0
  %457 = vmatpush1.bf16.msra.mxu0 0
  %458 = vmatprep.subr.bf16.mxu0 0
  %459 = vmatpush1.bf16.msra.mxu0 0
  %460 = vmatprep.mubr.bf16.mxu0 0
  %461 = vmatmul.mubr.bf16.gmra.mrb[0].mxu0 %v66
  %v462 = vpop.f32.mrb[0].mxu0
  %v463 = vadd.f32 %v128, %v462
  %v464 = vpop.f32.mrb[0].mxu0
  %v465 = vadd.f32 %v132, %v464
  %v466 = vpop.f32.mrb[0].mxu0
  %v467 = vpop.f32.mrb[0].mxu0
  %468 = vdwg.mxu0
  %469 = vmatprep.subr.bf16.mxu0 %v296
  %470 = vmatpush1.bf16.msra.mxu0 %v295
  %471 = vmatprep.subr.bf16.mxu0 %v302
  %472 = vmatpush1.bf16.msra.mxu0 %v301
  %473 = vmatprep.subr.bf16.mxu0 %v308
  %474 = vmatpush1.bf16.msra.mxu0 %v307
  %475 = vmatprep.subr.bf16.mxu0 %v314
  %476 = vmatpush1.bf16.msra.mxu0 %v313
  %477 = vmatprep.subr.bf16.mxu0 %v320
  %478 = vmatpush1.bf16.msra.mxu0 %v319
  %479 = vmatprep.subr.bf16.mxu0 %v326
  %480 = vmatpush1.bf16.msra.mxu0 %v325
  %481 = vmatprep.subr.bf16.mxu0 %v332
  %482 = vmatpush1.bf16.msra.mxu0 %v331
  %483 = vmatprep.subr.bf16.mxu0 %v338
  %484 = vmatpush1.bf16.msra.mxu0 %v337
  %485 = vmatprep.subr.bf16.mxu0 0
  %486 = vmatpush1.bf16.msra.mxu0 0
  %487 = vmatprep.subr.bf16.mxu0 0
  %488 = vmatpush1.bf16.msra.mxu0 0
  %489 = vmatprep.subr.bf16.mxu0 0
  %490 = vmatpush1.bf16.msra.mxu0 0
  %491 = vmatprep.subr.bf16.mxu0 0
  %492 = vmatpush1.bf16.msra.mxu0 0
  %493 = vmatprep.subr.bf16.mxu0 0
  %494 = vmatpush1.bf16.msra.mxu0 0
  %495 = vmatprep.subr.bf16.mxu0 0
  %496 = vmatpush1.bf16.msra.mxu0 0
  %497 = vmatprep.subr.bf16.mxu0 0
  %498 = vmatpush1.bf16.msra.mxu0 0
  %499 = vmatprep.subr.bf16.mxu0 0
  %500 = vmatpush1.bf16.msra.mxu0 0
  %501 = vmatprep.mubr.bf16.mxu0 0
  %502 = vmatmul.mubr.bf16.gmra.mrb[0].mxu0 %v66
  %v503 = vpop.f32.mrb[0].mxu0
  %v504 = vadd.f32 %v136, %v503
  %v505 = vpop.f32.mrb[0].mxu0
  %v506 = vadd.f32 %v140, %v505
  %v507 = vpop.f32.mrb[0].mxu0
  %v508 = vpop.f32.mrb[0].mxu0
  %509 = vdwg.mxu0
  %v510 = vmax.f32 %v422, 0.0
  %v511 = vmax.f32 %v424, 0.0
  %v512 = vmax.f32 %v463, 0.0
  %v513 = vmax.f32 %v465, 0.0
  %v514 = vmax.f32 %v504, 0.0
  %v515 = vmax.f32 %v506, 0.0
  %v516 = vpack.c.bf16 %v510, %v510
  %v517 = vpack.c.bf16 %v511, %v511
  %v518 = vpack.c.bf16 %v512, %v512
  %v519 = vpack.c.bf16 %v513, %v513
  %v520 = vpack.c.bf16 %v514, %v514
  %v521 = vpack.c.bf16 %v515, %v515
  %v522 = vld [vmem:[%s5] sm:$0xf]
  %v523 = vld [vmem:[%s5 + $0x4] sm:$0xf]
  %v524 = vld [vmem:[%s5 + $0x8] sm:$0xf]
  %v525 = vld [vmem:[%s5 + $0xc] sm:$0xf]
  %v526 = vld [vmem:[%s5 + $0x10] sm:$0xf]
  %v527 = vld [vmem:[%s5 + $0x14] sm:$0xf]
  %v528 = vld [vmem:[%s5 + $0x18] sm:$0xf]
  %v529 = vld [vmem:[%s5 + $0x1c] sm:$0xf]
  %v530 = vld [vmem:[%s5 + $0x20] sm:$0xf]
  %v531 = vld [vmem:[%s5 + $0x24] sm:$0xf]
  %v532 = vld [vmem:[%s5 + $0x28] sm:$0xf]
  %v533 = vld [vmem:[%s5 + $0x2c] sm:$0xf]
  %v534 = vld [vmem:[%s5 + $0x30] sm:$0xf]
  %v535 = vld [vmem:[%s5 + $0x34] sm:$0xf]
  %v536 = vld [vmem:[%s5 + $0x38] sm:$0xf]
  %v537 = vld [vmem:[%s5 + $0x3c] sm:$0xf]
  %v538 = vld [vmem:[%s5 + $0x40] sm:$0xf]
  %v539 = vld [vmem:[%s5 + $0x44] sm:$0xf]
  %v540 = vld [vmem:[%s5 + $0x48] sm:$0xf]
  %v541 = vld [vmem:[%s5 + $0x4c] sm:$0xf]
  %v542 = vld [vmem:[%s5 + $0x50] sm:$0xf]
  %v543 = vld [vmem:[%s5 + $0x54] sm:$0xf]
  %v544 = vld [vmem:[%s5 + $0x58] sm:$0xf]
  %v545 = vld [vmem:[%s5 + $0x5c] sm:$0xf]
  %v546 = vld [vmem:[%s5 + $0x60] sm:$0xf]
  %v547 = vld [vmem:[%s5 + $0x64] sm:$0xf]
  %v548 = vld [vmem:[%s5 + $0x68] sm:$0xf]
  %v549 = vld [vmem:[%s5 + $0x6c] sm:$0xf]
  %v550 = vld [vmem:[%s5 + $0x70] sm:$0xf]
  %v551 = vld [vmem:[%s5 + $0x74] sm:$0xf]
  %v552 = vld [vmem:[%s5 + $0x78] sm:$0xf]
  %v553 = vld [vmem:[%s5 + $0x7c] sm:$0xf]
  %v554 = vld [vmem:[%s6] sm:$0x1]
  %v555 = vlaneseq
  %v556 = vshrl.u32 %v555, 7
  %v557 = vsub.s32 0, %v556
  %v558 = vrot.slane %v554, %v557
  %v591 = vunpack.c.l.b16 %v522
  %v592 = vunpack.c.l.b16 %v523
  %v593 = vunpack.c.l.b16 %v524
  %v594 = vunpack.c.l.b16 %v525
  %v595 = vunpack.c.l.b16 %v526
  %v596 = vunpack.c.l.b16 %v527
  %v597 = vunpack.c.l.b16 %v528
  %v598 = vunpack.c.l.b16 %v529
  %v599 = vunpack.c.l.b16 %v530
  %v600 = vunpack.c.l.b16 %v531
  %v601 = vunpack.c.l.b16 %v532
  %v602 = vunpack.c.l.b16 %v533
  %v603 = vunpack.c.l.b16 %v534
  %v604 = vunpack.c.l.b16 %v535
  %v605 = vunpack.c.l.b16 %v536
  %v606 = vunpack.c.l.b16 %v537
  %v607 = vunpack.c.l.b16 %v538
  %v608 = vunpack.c.l.b16 %v539
  %v609 = vunpack.c.l.b16 %v540
  %v610 = vunpack.c.l.b16 %v541
  %v611 = vunpack.c.l.b16 %v542
  %v612 = vunpack.c.l.b16 %v543
  %v613 = vunpack.c.l.b16 %v544
  %v614 = vunpack.c.l.b16 %v545
  %v615 = vunpack.c.l.b16 %v546
  %v616 = vunpack.c.l.b16 %v547
  %v617 = vunpack.c.l.b16 %v548
  %v618 = vunpack.c.l.b16 %v549
  %v619 = vunpack.c.l.b16 %v550
  %v620 = vunpack.c.l.b16 %v551
  %v621 = vunpack.c.l.b16 %v552
  %v622 = vunpack.c.l.b16 %v553
  %v623 = vpack.c.b16 %v592, %v591
  %v624 = vpack.c.b16 %v594, %v593
  %v625 = vpack.c.b16 %v596, %v595
  %v626 = vpack.c.b16 %v598, %v597
  %v627 = vpack.c.b16 %v600, %v599
  %v628 = vpack.c.b16 %v602, %v601
  %v629 = vpack.c.b16 %v604, %v603
  %v630 = vpack.c.b16 %v606, %v605
  %v631 = vpack.c.b16 %v608, %v607
  %v632 = vpack.c.b16 %v610, %v609
  %v633 = vpack.c.b16 %v612, %v611
  %v634 = vpack.c.b16 %v614, %v613
  %v635 = vpack.c.b16 %v616, %v615
  %v636 = vpack.c.b16 %v618, %v617
  %v637 = vpack.c.b16 %v620, %v619
  %v638 = vpack.c.b16 %v622, %v621
  %655 = vmatprep.subr.bf16.mxu0 0
  %656 = vmatpush1.bf16.msra.mxu0 %v623
  %657 = vmatprep.subr.bf16.mxu0 0
  %658 = vmatpush1.bf16.msra.mxu0 %v624
  %659 = vmatprep.subr.bf16.mxu0 0
  %660 = vmatpush1.bf16.msra.mxu0 %v625
  %661 = vmatprep.subr.bf16.mxu0 0
  %662 = vmatpush1.bf16.msra.mxu0 %v626
  %663 = vmatprep.subr.bf16.mxu0 0
  %664 = vmatpush1.bf16.msra.mxu0 %v627
  %665 = vmatprep.subr.bf16.mxu0 0
  %666 = vmatpush1.bf16.msra.mxu0 %v628
  %667 = vmatprep.subr.bf16.mxu0 0
  %668 = vmatpush1.bf16.msra.mxu0 %v629
  %669 = vmatprep.subr.bf16.mxu0 0
  %670 = vmatpush1.bf16.msra.mxu0 %v630
  %671 = vmatprep.subr.bf16.mxu0 0
  %672 = vmatpush1.bf16.msra.mxu0 %v631
  %673 = vmatprep.subr.bf16.mxu0 0
  %674 = vmatpush1.bf16.msra.mxu0 %v632
  %675 = vmatprep.subr.bf16.mxu0 0
  %676 = vmatpush1.bf16.msra.mxu0 %v633
  %677 = vmatprep.subr.bf16.mxu0 0
  %678 = vmatpush1.bf16.msra.mxu0 %v634
  %679 = vmatprep.subr.bf16.mxu0 0
  %680 = vmatpush1.bf16.msra.mxu0 %v635
  %681 = vmatprep.subr.bf16.mxu0 0
  %682 = vmatpush1.bf16.msra.mxu0 %v636
  %683 = vmatprep.subr.bf16.mxu0 0
  %684 = vmatpush1.bf16.msra.mxu0 %v637
  %685 = vmatprep.subr.bf16.mxu0 0
  %686 = vmatpush1.bf16.msra.mxu0 %v638
  %687 = vmatprep.mubr.bf16.mxu0 %v517
  %688 = vmatmul.mubr.bf16.gmra.mrb[0].mxu0 %v516
  %v689 = vpop.f32.mrb[0].mxu0
  %v690 = vadd.f32 %v558, %v689
  %v691 = vpop.f32.mrb[0].mxu0
  %v692 = vpop.f32.mrb[0].mxu0
  %v693 = vpop.f32.mrb[0].mxu0
  %694 = vdwg.mxu0
  %v695 = vmax.f32 %v690, 0.0
  %v696 = vld [vmem:[%s7] sm:$0x1]
  %v697 = vlaneseq
  %v698 = vshrl.u32 %v697, 7
  %v699 = vsub.s32 0, %v698
  %v700 = vrot.slane %v696, %v699
  %v701 = vmul.f32 %v695, %v700
  %702 = vadd.xlane.f32.xlu0 %v701
  %v703 = vpop.xlane.xlu0 %702
  %v704 = vld [vmem:[%s8] sm:$0x1]
  %v705 = vlaneseq
  %v706 = vshrl.u32 %v705, 7
  %v707 = vsub.s32 0, %v706
  %v708 = vrot.slane %v704, %v707
  %v709 = vadd.f32 %v703, %v708
  %s710 = scalar_lea.vmem %s5, 128
  %v711 = vld [vmem:[%s710] sm:$0xf]
  %v712 = vld [vmem:[%s710 + $0x4] sm:$0xf]
  %v713 = vld [vmem:[%s710 + $0x8] sm:$0xf]
  %v714 = vld [vmem:[%s710 + $0xc] sm:$0xf]
  %v715 = vld [vmem:[%s710 + $0x10] sm:$0xf]
  %v716 = vld [vmem:[%s710 + $0x14] sm:$0xf]
  %v717 = vld [vmem:[%s710 + $0x18] sm:$0xf]
  %v718 = vld [vmem:[%s710 + $0x1c] sm:$0xf]
  %v719 = vld [vmem:[%s710 + $0x20] sm:$0xf]
  %v720 = vld [vmem:[%s710 + $0x24] sm:$0xf]
  %v721 = vld [vmem:[%s710 + $0x28] sm:$0xf]
  %v722 = vld [vmem:[%s710 + $0x2c] sm:$0xf]
  %v723 = vld [vmem:[%s710 + $0x30] sm:$0xf]
  %v724 = vld [vmem:[%s710 + $0x34] sm:$0xf]
  %v725 = vld [vmem:[%s710 + $0x38] sm:$0xf]
  %v726 = vld [vmem:[%s710 + $0x3c] sm:$0xf]
  %v727 = vld [vmem:[%s710 + $0x40] sm:$0xf]
  %v728 = vld [vmem:[%s710 + $0x44] sm:$0xf]
  %v729 = vld [vmem:[%s710 + $0x48] sm:$0xf]
  %v730 = vld [vmem:[%s710 + $0x4c] sm:$0xf]
  %v731 = vld [vmem:[%s710 + $0x50] sm:$0xf]
  %v732 = vld [vmem:[%s710 + $0x54] sm:$0xf]
  %v733 = vld [vmem:[%s710 + $0x58] sm:$0xf]
  %v734 = vld [vmem:[%s710 + $0x5c] sm:$0xf]
  %v735 = vld [vmem:[%s710 + $0x60] sm:$0xf]
  %v736 = vld [vmem:[%s710 + $0x64] sm:$0xf]
  %v737 = vld [vmem:[%s710 + $0x68] sm:$0xf]
  %v738 = vld [vmem:[%s710 + $0x6c] sm:$0xf]
  %v739 = vld [vmem:[%s710 + $0x70] sm:$0xf]
  %v740 = vld [vmem:[%s710 + $0x74] sm:$0xf]
  %v741 = vld [vmem:[%s710 + $0x78] sm:$0xf]
  %v742 = vld [vmem:[%s710 + $0x7c] sm:$0xf]
  %v743 = vld [vmem:[%s6 + $0x1] sm:$0x1]
  %v744 = vlaneseq
  %v745 = vshrl.u32 %v744, 7
  %v746 = vsub.s32 0, %v745
  %v747 = vrot.slane %v743, %v746
  %v780 = vunpack.c.l.b16 %v711
  %v781 = vunpack.c.l.b16 %v712
  %v782 = vunpack.c.l.b16 %v713
  %v783 = vunpack.c.l.b16 %v714
  %v784 = vunpack.c.l.b16 %v715
  %v785 = vunpack.c.l.b16 %v716
  %v786 = vunpack.c.l.b16 %v717
  %v787 = vunpack.c.l.b16 %v718
  %v788 = vunpack.c.l.b16 %v719
  %v789 = vunpack.c.l.b16 %v720
  %v790 = vunpack.c.l.b16 %v721
  %v791 = vunpack.c.l.b16 %v722
  %v792 = vunpack.c.l.b16 %v723
  %v793 = vunpack.c.l.b16 %v724
  %v794 = vunpack.c.l.b16 %v725
  %v795 = vunpack.c.l.b16 %v726
  %v796 = vunpack.c.l.b16 %v727
  %v797 = vunpack.c.l.b16 %v728
  %v798 = vunpack.c.l.b16 %v729
  %v799 = vunpack.c.l.b16 %v730
  %v800 = vunpack.c.l.b16 %v731
  %v801 = vunpack.c.l.b16 %v732
  %v802 = vunpack.c.l.b16 %v733
  %v803 = vunpack.c.l.b16 %v734
  %v804 = vunpack.c.l.b16 %v735
  %v805 = vunpack.c.l.b16 %v736
  %v806 = vunpack.c.l.b16 %v737
  %v807 = vunpack.c.l.b16 %v738
  %v808 = vunpack.c.l.b16 %v739
  %v809 = vunpack.c.l.b16 %v740
  %v810 = vunpack.c.l.b16 %v741
  %v811 = vunpack.c.l.b16 %v742
  %v812 = vpack.c.b16 %v781, %v780
  %v813 = vpack.c.b16 %v783, %v782
  %v814 = vpack.c.b16 %v785, %v784
  %v815 = vpack.c.b16 %v787, %v786
  %v816 = vpack.c.b16 %v789, %v788
  %v817 = vpack.c.b16 %v791, %v790
  %v818 = vpack.c.b16 %v793, %v792
  %v819 = vpack.c.b16 %v795, %v794
  %v820 = vpack.c.b16 %v797, %v796
  %v821 = vpack.c.b16 %v799, %v798
  %v822 = vpack.c.b16 %v801, %v800
  %v823 = vpack.c.b16 %v803, %v802
  %v824 = vpack.c.b16 %v805, %v804
  %v825 = vpack.c.b16 %v807, %v806
  %v826 = vpack.c.b16 %v809, %v808
  %v827 = vpack.c.b16 %v811, %v810
  %844 = vmatprep.subr.bf16.mxu0 0
  %845 = vmatpush1.bf16.msra.mxu0 %v812
  %846 = vmatprep.subr.bf16.mxu0 0
  %847 = vmatpush1.bf16.msra.mxu0 %v813
  %848 = vmatprep.subr.bf16.mxu0 0
  %849 = vmatpush1.bf16.msra.mxu0 %v814
  %850 = vmatprep.subr.bf16.mxu0 0
  %851 = vmatpush1.bf16.msra.mxu0 %v815
  %852 = vmatprep.subr.bf16.mxu0 0
  %853 = vmatpush1.bf16.msra.mxu0 %v816
  %854 = vmatprep.subr.bf16.mxu0 0
  %855 = vmatpush1.bf16.msra.mxu0 %v817
  %856 = vmatprep.subr.bf16.mxu0 0
  %857 = vmatpush1.bf16.msra.mxu0 %v818
  %858 = vmatprep.subr.bf16.mxu0 0
  %859 = vmatpush1.bf16.msra.mxu0 %v819
  %860 = vmatprep.subr.bf16.mxu0 0
  %861 = vmatpush1.bf16.msra.mxu0 %v820
  %862 = vmatprep.subr.bf16.mxu0 0
  %863 = vmatpush1.bf16.msra.mxu0 %v821
  %864 = vmatprep.subr.bf16.mxu0 0
  %865 = vmatpush1.bf16.msra.mxu0 %v822
  %866 = vmatprep.subr.bf16.mxu0 0
  %867 = vmatpush1.bf16.msra.mxu0 %v823
  %868 = vmatprep.subr.bf16.mxu0 0
  %869 = vmatpush1.bf16.msra.mxu0 %v824
  %870 = vmatprep.subr.bf16.mxu0 0
  %871 = vmatpush1.bf16.msra.mxu0 %v825
  %872 = vmatprep.subr.bf16.mxu0 0
  %873 = vmatpush1.bf16.msra.mxu0 %v826
  %874 = vmatprep.subr.bf16.mxu0 0
  %875 = vmatpush1.bf16.msra.mxu0 %v827
  %876 = vmatprep.mubr.bf16.mxu0 %v519
  %877 = vmatmul.mubr.bf16.gmra.mrb[0].mxu0 %v518
  %v878 = vpop.f32.mrb[0].mxu0
  %v879 = vadd.f32 %v747, %v878
  %v880 = vpop.f32.mrb[0].mxu0
  %v881 = vpop.f32.mrb[0].mxu0
  %v882 = vpop.f32.mrb[0].mxu0
  %883 = vdwg.mxu0
  %v884 = vmax.f32 %v879, 0.0
  %v885 = vld [vmem:[%s7 + $0x1] sm:$0x1]
  %v886 = vlaneseq
  %v887 = vshrl.u32 %v886, 7
  %v888 = vsub.s32 0, %v887
  %v889 = vrot.slane %v885, %v888
  %v890 = vmul.f32 %v884, %v889
  %891 = vadd.xlane.f32.xlu0 %v890
  %v892 = vpop.xlane.xlu0 %891
  %v893 = vld [vmem:[%s8 + $0x1] sm:$0x1]
  %v894 = vlaneseq
  %v895 = vshrl.u32 %v894, 7
  %v896 = vsub.s32 0, %v895
  %v897 = vrot.slane %v893, %v896
  %v898 = vadd.f32 %v892, %v897
  %s899 = scalar_lea.vmem %s5, 256
  %v900 = vld [vmem:[%s899] sm:$0xf]
  %v901 = vld [vmem:[%s899 + $0x4] sm:$0xf]
  %v902 = vld [vmem:[%s899 + $0x8] sm:$0xf]
  %v903 = vld [vmem:[%s899 + $0xc] sm:$0xf]
  %v904 = vld [vmem:[%s899 + $0x10] sm:$0xf]
  %v905 = vld [vmem:[%s899 + $0x14] sm:$0xf]
  %v906 = vld [vmem:[%s899 + $0x18] sm:$0xf]
  %v907 = vld [vmem:[%s899 + $0x1c] sm:$0xf]
  %v908 = vld [vmem:[%s899 + $0x20] sm:$0xf]
  %v909 = vld [vmem:[%s899 + $0x24] sm:$0xf]
  %v910 = vld [vmem:[%s899 + $0x28] sm:$0xf]
  %v911 = vld [vmem:[%s899 + $0x2c] sm:$0xf]
  %v912 = vld [vmem:[%s899 + $0x30] sm:$0xf]
  %v913 = vld [vmem:[%s899 + $0x34] sm:$0xf]
  %v914 = vld [vmem:[%s899 + $0x38] sm:$0xf]
  %v915 = vld [vmem:[%s899 + $0x3c] sm:$0xf]
  %v916 = vld [vmem:[%s899 + $0x40] sm:$0xf]
  %v917 = vld [vmem:[%s899 + $0x44] sm:$0xf]
  %v918 = vld [vmem:[%s899 + $0x48] sm:$0xf]
  %v919 = vld [vmem:[%s899 + $0x4c] sm:$0xf]
  %v920 = vld [vmem:[%s899 + $0x50] sm:$0xf]
  %v921 = vld [vmem:[%s899 + $0x54] sm:$0xf]
  %v922 = vld [vmem:[%s899 + $0x58] sm:$0xf]
  %v923 = vld [vmem:[%s899 + $0x5c] sm:$0xf]
  %v924 = vld [vmem:[%s899 + $0x60] sm:$0xf]
  %v925 = vld [vmem:[%s899 + $0x64] sm:$0xf]
  %v926 = vld [vmem:[%s899 + $0x68] sm:$0xf]
  %v927 = vld [vmem:[%s899 + $0x6c] sm:$0xf]
  %v928 = vld [vmem:[%s899 + $0x70] sm:$0xf]
  %v929 = vld [vmem:[%s899 + $0x74] sm:$0xf]
  %v930 = vld [vmem:[%s899 + $0x78] sm:$0xf]
  %v931 = vld [vmem:[%s899 + $0x7c] sm:$0xf]
  %v932 = vld [vmem:[%s6 + $0x2] sm:$0x1]
  %v933 = vlaneseq
  %v934 = vshrl.u32 %v933, 7
  %v935 = vsub.s32 0, %v934
  %v936 = vrot.slane %v932, %v935
  %v969 = vunpack.c.l.b16 %v900
  %v970 = vunpack.c.l.b16 %v901
  %v971 = vunpack.c.l.b16 %v902
  %v972 = vunpack.c.l.b16 %v903
  %v973 = vunpack.c.l.b16 %v904
  %v974 = vunpack.c.l.b16 %v905
  %v975 = vunpack.c.l.b16 %v906
  %v976 = vunpack.c.l.b16 %v907
  %v977 = vunpack.c.l.b16 %v908
  %v978 = vunpack.c.l.b16 %v909
  %v979 = vunpack.c.l.b16 %v910
  %v980 = vunpack.c.l.b16 %v911
  %v981 = vunpack.c.l.b16 %v912
  %v982 = vunpack.c.l.b16 %v913
  %v983 = vunpack.c.l.b16 %v914
  %v984 = vunpack.c.l.b16 %v915
  %v985 = vunpack.c.l.b16 %v916
  %v986 = vunpack.c.l.b16 %v917
  %v987 = vunpack.c.l.b16 %v918
  %v988 = vunpack.c.l.b16 %v919
  %v989 = vunpack.c.l.b16 %v920
  %v990 = vunpack.c.l.b16 %v921
  %v991 = vunpack.c.l.b16 %v922
  %v992 = vunpack.c.l.b16 %v923
  %v993 = vunpack.c.l.b16 %v924
  %v994 = vunpack.c.l.b16 %v925
  %v995 = vunpack.c.l.b16 %v926
  %v996 = vunpack.c.l.b16 %v927
  %v997 = vunpack.c.l.b16 %v928
  %v998 = vunpack.c.l.b16 %v929
  %v999 = vunpack.c.l.b16 %v930
  %v1000 = vunpack.c.l.b16 %v931
  %v1001 = vpack.c.b16 %v970, %v969
  %v1002 = vpack.c.b16 %v972, %v971
  %v1003 = vpack.c.b16 %v974, %v973
  %v1004 = vpack.c.b16 %v976, %v975
  %v1005 = vpack.c.b16 %v978, %v977
  %v1006 = vpack.c.b16 %v980, %v979
  %v1007 = vpack.c.b16 %v982, %v981
  %v1008 = vpack.c.b16 %v984, %v983
  %v1009 = vpack.c.b16 %v986, %v985
  %v1010 = vpack.c.b16 %v988, %v987
  %v1011 = vpack.c.b16 %v990, %v989
  %v1012 = vpack.c.b16 %v992, %v991
  %v1013 = vpack.c.b16 %v994, %v993
  %v1014 = vpack.c.b16 %v996, %v995
  %v1015 = vpack.c.b16 %v998, %v997
  %v1016 = vpack.c.b16 %v1000, %v999
  %1033 = vmatprep.subr.bf16.mxu0 0
  %1034 = vmatpush1.bf16.msra.mxu0 %v1001
  %1035 = vmatprep.subr.bf16.mxu0 0
  %1036 = vmatpush1.bf16.msra.mxu0 %v1002
  %1037 = vmatprep.subr.bf16.mxu0 0
  %1038 = vmatpush1.bf16.msra.mxu0 %v1003
  %1039 = vmatprep.subr.bf16.mxu0 0
  %1040 = vmatpush1.bf16.msra.mxu0 %v1004
  %1041 = vmatprep.subr.bf16.mxu0 0
  %1042 = vmatpush1.bf16.msra.mxu0 %v1005
  %1043 = vmatprep.subr.bf16.mxu0 0
  %1044 = vmatpush1.bf16.msra.mxu0 %v1006
  %1045 = vmatprep.subr.bf16.mxu0 0
  %1046 = vmatpush1.bf16.msra.mxu0 %v1007
  %1047 = vmatprep.subr.bf16.mxu0 0
  %1048 = vmatpush1.bf16.msra.mxu0 %v1008
  %1049 = vmatprep.subr.bf16.mxu0 0
  %1050 = vmatpush1.bf16.msra.mxu0 %v1009
  %1051 = vmatprep.subr.bf16.mxu0 0
  %1052 = vmatpush1.bf16.msra.mxu0 %v1010
  %1053 = vmatprep.subr.bf16.mxu0 0
  %1054 = vmatpush1.bf16.msra.mxu0 %v1011
  %1055 = vmatprep.subr.bf16.mxu0 0
  %1056 = vmatpush1.bf16.msra.mxu0 %v1012
  %1057 = vmatprep.subr.bf16.mxu0 0
  %1058 = vmatpush1.bf16.msra.mxu0 %v1013
  %1059 = vmatprep.subr.bf16.mxu0 0
  %1060 = vmatpush1.bf16.msra.mxu0 %v1014
  %1061 = vmatprep.subr.bf16.mxu0 0
  %1062 = vmatpush1.bf16.msra.mxu0 %v1015
  %1063 = vmatprep.subr.bf16.mxu0 0
  %1064 = vmatpush1.bf16.msra.mxu0 %v1016
  %1065 = vmatprep.mubr.bf16.mxu0 %v521
  %1066 = vmatmul.mubr.bf16.gmra.mrb[0].mxu0 %v520
  %v1067 = vpop.f32.mrb[0].mxu0
  %v1068 = vadd.f32 %v936, %v1067
  %v1069 = vpop.f32.mrb[0].mxu0
  %v1070 = vpop.f32.mrb[0].mxu0
  %v1071 = vpop.f32.mrb[0].mxu0
  %1072 = vdwg.mxu0
  %v1073 = vmax.f32 %v1068, 0.0
  %v1074 = vld [vmem:[%s7 + $0x2] sm:$0x1]
  %v1075 = vlaneseq
  %v1076 = vshrl.u32 %v1075, 7
  %v1077 = vsub.s32 0, %v1076
  %v1078 = vrot.slane %v1074, %v1077
  %v1079 = vmul.f32 %v1073, %v1078
  %1080 = vadd.xlane.f32.xlu0 %v1079
  %v1081 = vpop.xlane.xlu0 %1080
  %v1082 = vld [vmem:[%s8 + $0x2] sm:$0x1]
  %v1083 = vlaneseq
  %v1084 = vshrl.u32 %v1083, 7
  %v1085 = vsub.s32 0, %v1084
  %v1086 = vrot.slane %v1082, %v1085
  %v1087 = vadd.f32 %v1081, %v1086
  %1089 = vrot.lane.b32.xlu0 %v898, 1
  %v1090 = vpop.permute.xlu0 %1089
  %1093 = vrot.lane.b32.xlu0 %v1087, 2
  %v1094 = vpop.permute.xlu0 %1093
  %vm1096 = vcmask 7168
  %v1097 = vsel %vm1096, %v709, %v1090
  %vm1098 = vcmask 15360
  %v1099 = vsel %vm1098, %v1097, %v1094
  %vm1100 = vcmask 23552
  %v1101 = vsel %vm1100, %v1099, 0.0
  %v1102 = vxor.u32 %v1101, 2147483648
  %v1103 = vmul.f32 %v1102, 1.442695
  %v1104 = vpow.pop %v1103
  %v1105 = vadd.f32 %v1104, 1.0
  %v1106 = vrcp.pop %v1105
  %v1107 = vmul.f32 1.0, %v1106
  %1108 = vst [vmem:[%s9] sm:$0xff] %v1107
  // Predicated region
  $region38: #{model_forward.1} parent=0 // pred_check
    _
  $region39: #{model_forward.1} parent=0 // pred_check_branch
    %1110 = sbr.rel (0) target = $region41
  $region40: #{model_forward.1} parent=0 // pred_region
    _
  $region41: #{model_forward.1} parent=0 // pred_fallthru
    _
  // Predicated region
  $region42: #{model_forward.1} parent=0 // pred_check
    _
  $region43: #{model_forward.1} parent=0 // pred_check_branch
    %1112 = sbr.rel (0) target = $region45
  $region44: #{model_forward.1} parent=0 // pred_region
    _
  $region45: #{model_forward.1} parent=0 // pred_fallthru
    _

</llo_original>
